<compile_context>
chip_gen: v7x
topology: tpu7x:2x2x1
jax: 0.10.0
libtpu: 0.0.40
codegen_flags: <defaults>
</compile_context>

<pallas_src>
import jax
import jax.numpy as jnp
from jax.experimental import pallas as pl
from jax.experimental.pallas import tpu as pltpu


# ----------------------------- Pallas kernel ------------------------------ #

def _rope_kernel(x_ref, s_ref, c_ref, o_ref):
    """out = x * S + swap_halves(x) * C,  with S = [sin|sin], C = [-cos|cos]."""
    x = x_ref[0].astype(jnp.float32)           # (TS, d)
    d = x.shape[-1]
    half = d // 2
    S = s_ref[...]                             # (TS, d) float32
    C = c_ref[...]                             # (TS, d) float32

    if d % 128 == 0:
        # Lane-dense path: full-width VPU multiplies plus one XLU roll (shift by
        # d/2 swaps the two halves); single unmasked, lane-dense store.
        rolled = pltpu.roll(x, shift=half, axis=-1)
        o_ref[0] = (x * S + rolled * C).astype(o_ref.dtype)
    else:
        # Small / unaligned d (toy test, d=32): half-split math with two direct
        # sliced stores -- avoids materializing a concatenate temp.
        x_lo = x[:, :half]
        x_hi = x[:, half:]
        o_ref[0, :, :half] = (x_lo * S[:, :half] + x_hi * C[:, :half]).astype(o_ref.dtype)
        o_ref[0, :, half:] = (x_hi * S[:, half:] + x_lo * C[:, half:]).astype(o_ref.dtype)


def _pick_seq_tile(seq_len, d, x_itemsize, vmem_budget_bytes=12 * 1024 * 1024):
    """Largest seq tile whose double-buffered working set fits the VMEM budget.

    Per grid step Pallas double-buffers: x tile + out tile (x dtype) and the two
    float32 table tiles  ->  2 * TS * d * (2*itemsize + 8) bytes.
    """
    per_row = 2 * d * (2 * x_itemsize + 8)
    max_rows = max(8, vmem_budget_bytes // per_row)
    if max_rows >= seq_len:
        return seq_len
    ts = max(8, (int(max_rows) // 8) * 8)      # keep (8,128)-compatible sublane count
    while seq_len % ts != 0 and ts > 8:
        ts -= 8
    return ts if seq_len % ts == 0 else seq_len


def rope_pallas(x, s_table, c_table):
    """x: (n, seq_len, d); s_table/c_table: (seq_len, d) float32 -> (n, seq_len, d)."""
    n, seq_len, d = x.shape
    ts = _pick_seq_tile(seq_len, d, jnp.dtype(x.dtype).itemsize)
    num_tiles = seq_len // ts

    return pl.pallas_call(
        _rope_kernel,
        out_shape=jax.ShapeDtypeStruct((n, seq_len, d), x.dtype),
        grid_spec=pltpu.PrefetchScalarGridSpec(
            num_scalar_prefetch=0,
            # seq tiles outer, batch inner: table blocks keep the same block index
            # across the inner axis and their re-DMA is elided.
            grid=(num_tiles, n),
            in_specs=[
                pl.BlockSpec((1, ts, d), lambda t, i: (i, t, 0)),
                pl.BlockSpec((ts, d), lambda t, i: (t, 0)),
                pl.BlockSpec((ts, d), lambda t, i: (t, 0)),
            ],
            out_specs=pl.BlockSpec((1, ts, d), lambda t, i: (i, t, 0)),
        ),
        compiler_params=pltpu.CompilerParams(
            dimension_semantics=("parallel", "parallel"),
            vmem_limit_bytes=32 * 1024 * 1024,
        ),
    )(x, s_table, c_table)


# --------------------------- Module-equivalent glue ------------------------ #

def make_sinusoid(dim, max_len=1024):
    """Reproduces RotaryPositionalEmbedding.__init__'s `sinusoid` buffer."""
    half = dim // 2                                   # self.dim in the module
    inv_freq = 1.0 / (10000.0 ** (jnp.arange(0.0, half, 2.0,
                                             dtype=jnp.float32) / half))
    t = jnp.arange(max_len, dtype=jnp.float32)[:, None]      # (max_len, 1)
    freqs = t * inv_freq[None, :]                             # (max_len, half//2)
    return jnp.concatenate([jnp.sin(freqs), jnp.cos(freqs)], axis=-1)


def make_rope_tables(sinusoid, seq_len, d, offset=0):
    """Precompute full-width tables S=[sin|sin], C=[-cos|cos] (float32), once.

    Mirrors the module forward's repeat_interleave(2) + half-split, folded into
    lane-dense full-width tables so the kernel does only whole-row multiplies.
    """
    sl = sinusoid[offset:offset + seq_len, :]                  # (seq_len, dim//2)
    sl = jnp.repeat(sl, 2, axis=1)                             # repeat_interleave(2, dim=1)
    sin_part = sl[:, : d // 2].astype(jnp.float32)
    cos_part = sl[:, d // 2:].astype(jnp.float32)
    s_table = jnp.concatenate([sin_part, sin_part], axis=-1)   # (seq_len, d)
    c_table = jnp.concatenate([-cos_part, cos_part], axis=-1)  # (seq_len, d)
    return s_table, c_table


def rotary_positional_embedding(x, sinusoid, offset=0):
    """Forward pass of the PyTorch module, with the hot path in Pallas."""
    n, seq_len, d = x.shape
    s_table, c_table = make_rope_tables(sinusoid, seq_len, d, offset)
    return rope_pallas(x, s_table, c_table)


def _reference(x, sinusoid, offset=0):
    """Pure-JAX reference matching the PyTorch forward exactly."""
    n, seq_len, d = x.shape
    sl = jnp.repeat(sinusoid[offset:offset + seq_len, :], 2, axis=1)
    sin_part, cos_part = sl[:, : d // 2], sl[:, d // 2:]
    x_sin = x[:, :, : d // 2] * sin_part - x[:, :, d // 2:] * cos_part
    x_cos = x[:, :, : d // 2] * cos_part + x[:, :, d // 2:] * sin_part
    return jnp.concatenate([x_sin, x_cos], axis=-1)


# --------------------------------- main ------------------------------------ #

if __name__ == "__main__":
    batch, seq_len, dim = 2, 8, 32
    max_len = 1024
    offset = 0

    key = jax.random.PRNGKey(0)
    x = jax.random.normal(key, (batch, seq_len, dim), dtype=jnp.float32)

    sinusoid = make_sinusoid(dim, max_len=max_len)   # deterministic "buffer"

    out = rotary_positional_embedding(x, sinusoid, offset=offset)
    out = jax.block_until_ready(out)

    ref = _reference(x, sinusoid, offset=offset)
    assert out.shape == (batch, seq_len, dim)
    assert jnp.allclose(out, ref, atol=1e-5, rtol=1e-5)

    print("KERNEL_OK")
</pallas_src>

<mosaic_0001>
module attributes {stable_mosaic.version = 11 : i64} {
  func.func @_rope_kernel(%arg0: i32, %arg1: i32, %arg2: memref<1x8x32xf32, #tpu.memory_space<vmem>>, %arg3: memref<8x32xf32, #tpu.memory_space<vmem>>, %arg4: memref<8x32xf32, #tpu.memory_space<vmem>>, %arg5: memref<1x8x32xf32, #tpu.memory_space<vmem>>) attributes {dimension_semantics = [#tpu.dimension_semantics<parallel>, #tpu.dimension_semantics<parallel>], iteration_bounds = array<i64: 1, 2>, scalar_prefetch = 0 : i64, scratch_operands = 0 : i64, tpu.core_type = #tpu.core_type<tc>, window_params = [{transform_indices = @transform_0, window_bounds = array<i64: 1, 8, 32>}, {transform_indices = @transform_1, window_bounds = array<i64: 8, 32>}, {transform_indices = @transform_2, window_bounds = array<i64: 8, 32>}, {transform_indices = @transform_3, window_bounds = array<i64: 1, 8, 32>}]} {
    %c0 = arith.constant 0 : index
    %c0_0 = arith.constant 0 : index
    %c0_1 = arith.constant 0 : index
    %0 = vector.load %arg2[%c0, %c0_0, %c0_1] : memref<1x8x32xf32, #tpu.memory_space<vmem>>, vector<1x8x32xf32>
    %1 = vector.shape_cast %0 : vector<1x8x32xf32> to vector<8x32xf32>
    %c0_2 = arith.constant 0 : index
    %c0_3 = arith.constant 0 : index
    %2 = vector.load %arg3[%c0_2, %c0_3] : memref<8x32xf32, #tpu.memory_space<vmem>>, vector<8x32xf32>
    %c0_4 = arith.constant 0 : index
    %c0_5 = arith.constant 0 : index
    %3 = vector.load %arg4[%c0_4, %c0_5] : memref<8x32xf32, #tpu.memory_space<vmem>>, vector<8x32xf32>
    %4 = vector.extract_strided_slice %1 {offsets = [0, 0], sizes = [8, 16], strides = [1, 1]} : vector<8x32xf32> to vector<8x16xf32>
    %5 = vector.extract_strided_slice %1 {offsets = [0, 16], sizes = [8, 16], strides = [1, 1]} : vector<8x32xf32> to vector<8x16xf32>
    %6 = vector.extract_strided_slice %2 {offsets = [0, 0], sizes = [8, 16], strides = [1, 1]} : vector<8x32xf32> to vector<8x16xf32>
    %7 = arith.mulf %4, %6 : vector<8x16xf32>
    %8 = vector.extract_strided_slice %3 {offsets = [0, 0], sizes = [8, 16], strides = [1, 1]} : vector<8x32xf32> to vector<8x16xf32>
    %9 = arith.mulf %5, %8 : vector<8x16xf32>
    %10 = arith.addf %7, %9 : vector<8x16xf32>
    %c0_6 = arith.constant 0 : index
    %c0_7 = arith.constant 0 : index
    %c0_8 = arith.constant 0 : index
    %11 = vector.load %arg5[%c0_6, %c0_7, %c0_8] : memref<1x8x32xf32, #tpu.memory_space<vmem>>, vector<1x8x16xf32>
    %12 = vector.shape_cast %11 : vector<1x8x16xf32> to vector<8x16xf32>
    %13 = vector.shape_cast %10 : vector<8x16xf32> to vector<1x8x16xf32>
    tpu.vector_store %arg5[%c0_6, %c0_7, %c0_8], %13 {strides = array<i32>} : memref<1x8x32xf32, #tpu.memory_space<vmem>>, vector<1x8x16xf32>,
    %14 = vector.extract_strided_slice %2 {offsets = [0, 16], sizes = [8, 16], strides = [1, 1]} : vector<8x32xf32> to vector<8x16xf32>
    %15 = arith.mulf %5, %14 : vector<8x16xf32>
    %16 = vector.extract_strided_slice %3 {offsets = [0, 16], sizes = [8, 16], strides = [1, 1]} : vector<8x32xf32> to vector<8x16xf32>
    %17 = arith.mulf %4, %16 : vector<8x16xf32>
    %18 = arith.addf %15, %17 : vector<8x16xf32>
    %c0_9 = arith.constant 0 : index
    %c0_10 = arith.constant 0 : index
    %c16 = arith.constant 16 : index
    %19 = vector.load %arg5[%c0_9, %c0_10, %c16] : memref<1x8x32xf32, #tpu.memory_space<vmem>>, vector<1x8x16xf32>
    %20 = vector.shape_cast %19 : vector<1x8x16xf32> to vector<8x16xf32>
    %21 = vector.shape_cast %18 : vector<8x16xf32> to vector<1x8x16xf32>
    tpu.vector_store %arg5[%c0_9, %c0_10, %c16], %21 {strides = array<i32>} : memref<1x8x32xf32, #tpu.memory_space<vmem>>, vector<1x8x16xf32>,
    return
  }
  func.func @transform_0(%arg0: i32, %arg1: i32) -> (i32, i32, i32) {
    %c0_i32 = arith.constant 0 : i32
    %c0_i32_0 = arith.constant 0 : i32
    return %arg1, %arg0, %c0_i32 : i32, i32, i32
  }
  func.func @transform_1(%arg0: i32, %arg1: i32) -> (i32, i32) {
    %c0_i32 = arith.constant 0 : i32
    %c0_i32_0 = arith.constant 0 : i32
    return %arg0, %c0_i32 : i32, i32
  }
  func.func @transform_2(%arg0: i32, %arg1: i32) -> (i32, i32) {
    %c0_i32 = arith.constant 0 : i32
    %c0_i32_0 = arith.constant 0 : i32
    return %arg0, %c0_i32 : i32, i32
  }
  func.func @transform_3(%arg0: i32, %arg1: i32) -> (i32, i32, i32) {
    %c0_i32 = arith.constant 0 : i32
    %c0_i32_0 = arith.constant 0 : i32
    return %arg1, %arg0, %c0_i32 : i32, i32, i32
  }
}

</mosaic_0001>

<llo_original>
// kernel: tpu_custom_call.1
$region0: #{tpu_custom_call.1}
  #allocation0 [shape = 'u32[]', space=smem, size = 0x4, offset = 0x4, fixed_abs, tag = 'smem constant byte address 0x4 - core index']
  #allocation1 [shape = 'u32[144,128]{1,0:T(1,128)}', space=vmem, size = 0x12000, scoped, tag = 'internal scratch']
  %s0 = inlined_call_operand.hbm [shape: f32[2,8,32], index: 0, kind: input, shape index: {}]
  %s1 = inlined_call_operand.hbm [shape: f32[8,32], index: 1, kind: input, shape index: {}]
  %s2 = inlined_call_operand.hbm [shape: f32[8,32], index: 2, kind: input, shape index: {}]
  %s3 = inlined_call_operand.hbm [shape: f32[2,8,32], index: 3, kind: output, shape index: {}]
  %s4 = sld [smem:[#allocation0]]
  $region57: #{tpu_custom_call.1} parent=0
    _
  %s6 = ssub.s32 1, %s4
  %s7 = scalar_select 0, %s6, %s4
  $region1: #{tpu_custom_call.1} parent=0
    #allocation2 [shape = 'u8[8192]{0}', space=vmem, size = 0x2000, scoped, tag = 'input window, operand 0']
    #allocation3 [shape = 's32[2]{0}', space=sflag, size = 0x8, scoped, tag = 'scoped memory for tpu_custom_call.1']
    #allocation4 [shape = 's32[2]{0}', space=sflag, size = 0x8, scoped, tag = 'scoped memory for tpu_custom_call.1']
    #allocation5 [shape = 'u8[4096]{0}', space=vmem, size = 0x1000, scoped, tag = 'input window, operand 1, single buffered']
    #allocation6 [shape = 's32[1]{0}', space=sflag, size = 0x4, scoped, tag = 'scoped memory for tpu_custom_call.1']
    #allocation7 [shape = 'u8[4096]{0}', space=vmem, size = 0x1000, scoped, tag = 'input window, operand 2, single buffered']
    #allocation8 [shape = 'u8[8192]{0}', space=vmem, size = 0x2000, scoped, tag = 'output window, operand 0']
    %8 = vsyncpa [#allocation3], 0
    %s9 = scalar_lea.sflag [#allocation3], 1
    %10 = vsyncpa %s9, 0
    %11 = vsyncpa [#allocation6], 0
    %12 = vsyncpa [#allocation4], 0
    %s13 = scalar_lea.sflag [#allocation4], 1
    %14 = vsyncpa %s13, 0
    loop: start=0, step=1, limit=4
    $region2: #{tpu_custom_call.1} parent=1 // loop_pre_header
      _
    $region3: #{tpu_custom_call.1} parent=1 // loop_header
      %s16 = sphi 0, %s20
      %p17 = scmp.ge.s32.totalorder %s16, 4
      %s23 = sphi 0, %s35
      %s24 = sphi 0, %s31
      %s25 = sphi 0, %s23
      %s26 = sphi 0, %s24
      %s27 = sphi 0, %s25
      %s28 = sphi 0, %s26
      %s40 = sphi 0, %s42
      %s43 = sphi 0, %s40
      %s44 = sphi 0, %s43
      %s60 = sphi 0, %s44
      %s66 = sphi 0, %s68
      %s69 = sphi 0, %s66
      %s70 = sphi 0, %s69
      %s86 = sphi 0, %s70
      %s92 = sphi 0, %s94
      %s95 = sphi 0, %s92
      %s96 = sphi 0, %s95
      %s112 = sphi 0, %s96
      %s120 = sphi 0, %s122
      %s123 = sphi 0, %s120
      %s124 = sphi 0, %s123
      %s140 = sphi 0, %s124
    $region4: #{tpu_custom_call.1} parent=1 // loop_header_branch
      %19 = sbr.rel (%p17) target = $region8
    $region5: #{tpu_custom_call.1} parent=1 // loop_body
      %s21 = ssub.s32 %s16, 1
      %s22 = ssub.s32 %s16, 2
      %s29 = sadd.s32 1, %s24
      %p30 = scmp.ge.s32.totalorder %s29, 2
      %s31 = scalar_select %p30, 0, %s29
      %s32 = sadd.s32 1, %s23
      %s33 = scalar_select %p30, %s32, %s23
      %p34 = scmp.ge.s32.totalorder %s33, 1
      %s35 = scalar_select %p34, 0, %s33
      %s36 = ssub.s32 %s24, %s31
      %s37 = ssub.s32 %s23, %s35
      %s38 = sor.u32 %s36, %s37
      %p39 = scmp.eq.s32.totalorder %s38, 0
      %s41 = sadd.s32 %s40, 1
      %s42 = scalar_select %p39, %s40, %s41
      %p45 = pneg %p39
      %p46 = scmp.eq.s32.totalorder %s16, 1
      %p47 = por %p45, %p46
      %p48 = scmp.ne.s32.totalorder %s40, %s43
      %p49 = scmp.eq.s32.totalorder %s16, 0
      %p50 = por %p48, %p49
      %p51 = scmp.ne.s32.totalorder %s40, %s43
      %p52 = scmp.eq.s32.totalorder %s21, 1
      %p53 = por %p51, %p52
      %p54 = scmp.ne.s32.totalorder %s43, %s44
      %p55 = scmp.eq.s32.totalorder %s21, 0
      %p56 = por %p54, %p55
      %p57 = scmp.ne.s32.totalorder %s43, %s44
      %p58 = scmp.eq.s32.totalorder %s22, 1
      %p59 = por %p57, %p58
      %p61 = scmp.ne.s32.totalorder %s44, %s60
      %p62 = scmp.eq.s32.totalorder %s22, 0
      %p63 = por %p61, %p62
      %s64 = ssub.s32 %s23, %s35
      %p65 = scmp.eq.s32.totalorder %s64, 0
      %s67 = sadd.s32 %s66, 1
      %s68 = scalar_select %p65, %s66, %s67
      %p71 = pneg %p65
      %p72 = scmp.eq.s32.totalorder %s16, 1
      %p73 = por %p71, %p72
      %p74 = scmp.ne.s32.totalorder %s66, %s69
      %p75 = scmp.eq.s32.totalorder %s16, 0
      %p76 = por %p74, %p75
      %p77 = scmp.ne.s32.totalorder %s66, %s69
      %p78 = scmp.eq.s32.totalorder %s21, 1
      %p79 = por %p77, %p78
      %p80 = scmp.ne.s32.totalorder %s69, %s70
      %p81 = scmp.eq.s32.totalorder %s21, 0
      %p82 = por %p80, %p81
      %p83 = scmp.ne.s32.totalorder %s69, %s70
      %p84 = scmp.eq.s32.totalorder %s22, 1
      %p85 = por %p83, %p84
      %p87 = scmp.ne.s32.totalorder %s70, %s86
      %p88 = scmp.eq.s32.totalorder %s22, 0
      %p89 = por %p87, %p88
      %s90 = ssub.s32 %s23, %s35
      %p91 = scmp.eq.s32.totalorder %s90, 0
      %s93 = sadd.s32 %s92, 1
      %s94 = scalar_select %p91, %s92, %s93
      %p97 = pneg %p91
      %p98 = scmp.eq.s32.totalorder %s16, 1
      %p99 = por %p97, %p98
      %p100 = scmp.ne.s32.totalorder %s92, %s95
      %p101 = scmp.eq.s32.totalorder %s16, 0
      %p102 = por %p100, %p101
      %p103 = scmp.ne.s32.totalorder %s92, %s95
      %p104 = scmp.eq.s32.totalorder %s21, 1
      %p105 = por %p103, %p104
      %p106 = scmp.ne.s32.totalorder %s95, %s96
      %p107 = scmp.eq.s32.totalorder %s21, 0
      %p108 = por %p106, %p107
      %p109 = scmp.ne.s32.totalorder %s95, %s96
      %p110 = scmp.eq.s32.totalorder %s22, 1
      %p111 = por %p109, %p110
      %p113 = scmp.ne.s32.totalorder %s96, %s112
      %p114 = scmp.eq.s32.totalorder %s22, 0
      %p115 = por %p113, %p114
      %s116 = ssub.s32 %s24, %s31
      %s117 = ssub.s32 %s23, %s35
      %s118 = sor.u32 %s116, %s117
      %p119 = scmp.eq.s32.totalorder %s118, 0
      %s121 = sadd.s32 %s120, 1
      %s122 = scalar_select %p119, %s120, %s121
      %p125 = pneg %p119
      %p126 = scmp.eq.s32.totalorder %s16, 1
      %p127 = por %p125, %p126
      %p128 = scmp.ne.s32.totalorder %s120, %s123
      %p129 = scmp.eq.s32.totalorder %s16, 0
      %p130 = por %p128, %p129
      %p131 = scmp.ne.s32.totalorder %s120, %s123
      %p132 = scmp.eq.s32.totalorder %s21, 1
      %p133 = por %p131, %p132
      %p134 = scmp.ne.s32.totalorder %s123, %s124
      %p135 = scmp.eq.s32.totalorder %s21, 0
      %p136 = por %p134, %p135
      %p137 = scmp.ne.s32.totalorder %s123, %s124
      %p138 = scmp.eq.s32.totalorder %s22, 1
      %p139 = por %p137, %p138
      %p141 = scmp.ne.s32.totalorder %s124, %s140
      %p142 = scmp.eq.s32.totalorder %s22, 0
      %p143 = por %p141, %p142
      %p144 = scmp.le.s32.totalorder 1, %s16
      %p145 = scmp.lt.s32.totalorder %s16, 3
      %p146 = pnand %p144, %p145
      %p147 = pneg %p146
      // Predicated region
      $region9: #{tpu_custom_call.1} parent=5 // pred_check
        _
      $region10: #{tpu_custom_call.1} parent=5 // pred_check_branch
        %149 = sbr.rel (%p146) target = $region12
      $region11: #{tpu_custom_call.1} parent=5 // pred_region
        %s150 = ssub.s32 %s16, 1
        // Predicated region
        $region13: #{tpu_custom_call.1} parent=11 // pred_check
          %p151 = pneg %p82
        $region14: #{tpu_custom_call.1} parent=11 // pred_check_branch
          %153 = sbr.rel (%p151) target = $region16
        $region15: #{tpu_custom_call.1} parent=11 // pred_region
          %s155 = ssub.s32 128, 128
          %156 = vsyncadd [#allocation6], %s155
          %s157 = smul.addr %s25, 128
          %s158 = scalar_lea.hbm %s1, %s157
          %s160 = sshll.u32 [#allocation5], 4
          %s161 = int_to_ptr.vmem [resolvable:$true] %s160
          %163 = dma.hbm_to_vmem [thread:$0]  %s158, 128, %s161, [#allocation6]
        $region16: #{tpu_custom_call.1} parent=11 // pred_fallthru
          _
        // Predicated region
        $region17: #{tpu_custom_call.1} parent=11 // pred_check
          %p164 = pneg %p108
        $region18: #{tpu_custom_call.1} parent=11 // pred_check_branch
          %166 = sbr.rel (%p164) target = $region20
        $region19: #{tpu_custom_call.1} parent=11 // pred_region
          %s168 = ssub.s32 128, 128
          %169 = vsyncadd [#allocation6], %s168
          %s170 = smul.addr %s25, 128
          %s171 = scalar_lea.hbm %s2, %s170
          %s173 = sshll.u32 [#allocation7], 4
          %s174 = int_to_ptr.vmem [resolvable:$true] %s173
          %176 = dma.hbm_to_vmem [thread:$0]  %s171, 128, %s174, [#allocation6]
        $region20: #{tpu_custom_call.1} parent=11 // pred_fallthru
          _
      $region12: #{tpu_custom_call.1} parent=5 // pred_fallthru
        _
      %p177 = scmp.lt.s32.totalorder %s16, 2
      // Predicated region
      $region21: #{tpu_custom_call.1} parent=5 // pred_check
        %p178 = pneg %p177
      $region22: #{tpu_custom_call.1} parent=5 // pred_check_branch
        %180 = sbr.rel (%p178) target = $region24
      $region23: #{tpu_custom_call.1} parent=5 // pred_region
        // Predicated region
        $region25: #{tpu_custom_call.1} parent=23 // pred_check
          %p181 = pneg %p50
        $region26: #{tpu_custom_call.1} parent=23 // pred_check_branch
          %183 = sbr.rel (%p181) target = $region28
        $region27: #{tpu_custom_call.1} parent=23 // pred_region
          %s184 = sand.u32 %s40, 1
          %s185 = scalar_lea.sflag [#allocation3], %s184
          %s186 = sand.u32 %s40, 1
          %s187 = smul.addr %s186, 8
          %s188 = scalar_lea.vmem [#allocation2], %s187
          %s190 = ssub.s32 128, 128
          %191 = vsyncadd %s185, %s190
          %s192 = sadd.s32 %s23, %s24
          %s193 = smul.addr %s192, 128
          %s194 = scalar_lea.hbm %s0, %s193
          %s196 = sshll.u32 %s188, 4
          %s197 = int_to_ptr.vmem [resolvable:$true] %s196
          %199 = dma.hbm_to_vmem [thread:$0]  %s194, 128, %s197, %s185
        $region28: #{tpu_custom_call.1} parent=23 // pred_fallthru
          _
      $region24: #{tpu_custom_call.1} parent=5 // pred_fallthru
        _
      %p200 = scmp.le.s32.totalorder 1, %s16
      %p201 = scmp.lt.s32.totalorder %s16, 3
      %p202 = pnand %p200, %p201
      %p203 = pneg %p202
      // Predicated region
      $region29: #{tpu_custom_call.1} parent=5 // pred_check
        _
      $region30: #{tpu_custom_call.1} parent=5 // pred_check_branch
        %205 = sbr.rel (%p202) target = $region32
      $region31: #{tpu_custom_call.1} parent=5 // pred_region
        %s206 = ssub.s32 %s16, 1
        %s207 = sand.u32 %s43, 1
        %s208 = scalar_lea.sflag [#allocation3], %s207
        %s209 = sand.u32 %s43, 1
        %s210 = smul.addr %s209, 8
        %s211 = scalar_lea.vmem [#allocation2], %s210
        // Predicated region
        $region33: #{tpu_custom_call.1} parent=31 // pred_check
          %p212 = pneg %p56
        $region34: #{tpu_custom_call.1} parent=31 // pred_check_branch
          %214 = sbr.rel (%p212) target = $region36
        $region35: #{tpu_custom_call.1} parent=31 // pred_region
          %215 = dma.done %s208, 128
        $region36: #{tpu_custom_call.1} parent=31 // pred_fallthru
          _
        // Predicated region
        $region37: #{tpu_custom_call.1} parent=31 // pred_check
          %p216 = pneg %p82
        $region38: #{tpu_custom_call.1} parent=31 // pred_check_branch
          %218 = sbr.rel (%p216) target = $region40
        $region39: #{tpu_custom_call.1} parent=31 // pred_region
          %219 = dma.done [#allocation6], 128
        $region40: #{tpu_custom_call.1} parent=31 // pred_fallthru
          _
        // Predicated region
        $region41: #{tpu_custom_call.1} parent=31 // pred_check
          %p220 = pneg %p108
        $region42: #{tpu_custom_call.1} parent=31 // pred_check_branch
          %222 = sbr.rel (%p220) target = $region44
        $region43: #{tpu_custom_call.1} parent=31 // pred_region
          %223 = dma.done [#allocation6], 128
        $region44: #{tpu_custom_call.1} parent=31 // pred_fallthru
          _
        %s224 = sand.u32 %s43, 1
        %s225 = scalar_lea.sflag [#allocation3], %s224
        %s226 = sand.u32 %s43, 1
        %s227 = smul.addr %s226, 8
        %s228 = scalar_lea.vmem [#allocation2], %s227
        %p229 = pneg %p56
        %p230 = pneg %p53
        %p231 = pneg %p82
        %p232 = pneg %p79
        %p233 = pneg %p108
        %p234 = pneg %p105
        %p235 = pneg %p136
        %p236 = pneg %p133
        %s237 = sand.u32 %s123, 1
        %s238 = scalar_lea.sflag [#allocation4], %s237
        %s239 = sand.u32 %s123, 1
        %s240 = smul.addr %s239, 8
        %s241 = scalar_lea.vmem [#allocation8], %s240
        %v242 = vld [vmem:[%s211] sm:$0xff]
        %v243 = vld [vmem:[#allocation5] sm:$0xff]
        %v244 = vld [vmem:[#allocation7] sm:$0xff]
        %v245 = vmul.f32 %v242, %v243
        %247 = vrot.lane.b32.xlu0 %v244, 16
        %v248 = vpop.permute.xlu0 %247
        %v250 = vmul.f32 %v242, %v248
        %252 = vrot.lane.b32.xlu0 %v250, 112
        %v253 = vpop.permute.xlu0 %252
        %v255 = vadd.f32 %v245, %v253
        %vm256 = vcmask 130048
        %257 = vst.msk [vmem:[%s241] sm:$0xff] %vm256, %v255
        %258 = vrot.lane.b32.xlu0 %v244, 112
        %v259 = vpop.permute.xlu0 %258
        %v261 = vmul.f32 %v242, %v259
        %263 = vrot.lane.b32.xlu0 %v261, 16
        %v264 = vpop.permute.xlu0 %263
        %v266 = vadd.f32 %v245, %v264
        %vm267 = vcmask 261248
        %268 = vst.msk [vmem:[%s241] sm:$0xff] %vm267, %v266
        %s269 = sand.u32 %s123, 1
        %s270 = scalar_lea.sflag [#allocation4], %s269
        %s271 = sand.u32 %s123, 1
        %s272 = smul.addr %s271, 8
        %s273 = scalar_lea.vmem [#allocation8], %s272
        // Predicated region
        $region45: #{tpu_custom_call.1} parent=31 // pred_check
          %p274 = pneg %p133
        $region46: #{tpu_custom_call.1} parent=31 // pred_check_branch
          %276 = sbr.rel (%p274) target = $region48
        $region47: #{tpu_custom_call.1} parent=31 // pred_region
          %s278 = ssub.s32 128, 128
          %279 = vsyncadd %s270, %s278
          %s280 = sadd.s32 %s25, %s26
          %s281 = smul.addr %s280, 128
          %s282 = scalar_lea.hbm %s3, %s281
          %s284 = sshll.u32 %s273, 4
          %s285 = int_to_ptr.vmem [resolvable:$true] %s284
          %287 = dma.vmem_to_hbm [thread:$0]  %s285, 128, %s282, %s270
        $region48: #{tpu_custom_call.1} parent=31 // pred_fallthru
          _
      $region32: #{tpu_custom_call.1} parent=5 // pred_fallthru
        _
      %p288 = scmp.le.s32.totalorder 2, %s16
      // Predicated region
      $region49: #{tpu_custom_call.1} parent=5 // pred_check
        %p289 = pneg %p288
      $region50: #{tpu_custom_call.1} parent=5 // pred_check_branch
        %291 = sbr.rel (%p289) target = $region52
      $region51: #{tpu_custom_call.1} parent=5 // pred_region
        %s292 = ssub.s32 %s16, 2
        // Predicated region
        $region53: #{tpu_custom_call.1} parent=51 // pred_check
          %p293 = pneg %p139
        $region54: #{tpu_custom_call.1} parent=51 // pred_check_branch
          %295 = sbr.rel (%p293) target = $region56
        $region55: #{tpu_custom_call.1} parent=51 // pred_region
          %s296 = sand.u32 %s124, 1
          %s297 = scalar_lea.sflag [#allocation4], %s296
          %s298 = sand.u32 %s124, 1
          %s299 = smul.addr %s298, 8
          %s300 = scalar_lea.vmem [#allocation8], %s299
          %301 = dma.done %s297, 128
        $region56: #{tpu_custom_call.1} parent=51 // pred_fallthru
          _
      $region52: #{tpu_custom_call.1} parent=5 // pred_fallthru
        _
    $region6: #{tpu_custom_call.1} parent=1 // loop_footer
      %s20 = sadd.s32 1, %s16
    $region7: #{tpu_custom_call.1} parent=1 // loop_footer_branch
      %15 = sbr.rel target = $region3
    $region8: #{tpu_custom_call.1} parent=1 // loop_exit
      _
    %302 = vsyncpa [#allocation3], 1
    %s303 = scalar_lea.sflag [#allocation3], 1
    %304 = vsyncpa %s303, 1
    %305 = vsyncpa [#allocation6], 1
    %306 = vsyncpa [#allocation4], 1
    %s307 = scalar_lea.sflag [#allocation4], 1
    %308 = vsyncpa %s307, 1

</llo_original>
